<compile_context>
chip_gen: v7x
topology: tpu7x:2x2x1
jax: 0.10.0
libtpu: 0.0.40
codegen_flags: <defaults>
</compile_context>

<pallas_src>
import jax
import jax.numpy as jnp
from jax import lax
from jax.experimental import pallas as pl
from jax.experimental.pallas import tpu as pltpu

EPS = 1e-5
_MIB = 1024 * 1024


def _ln_kernel_bias(x_ref, w_ref, b_ref, o_ref):
    # x_ref: (row_tile, D); w_ref / b_ref: (1, D); o_ref: (row_tile, D).
    # NOTE: in a partial last block the padded rows contain uninitialized
    # VMEM; all math below is strictly per-row, so any NaN/Inf produced for
    # those rows is simply dropped by the masked writeback.
    x = x_ref[...].astype(jnp.float32)
    # Single-pass moments (E[x^2] - mean^2): fewer full-tile f32 temporaries
    # than the centered two-pass form (smaller VMEM footprint, less vld/vst
    # pressure). Slightly less numerically stable for huge-magnitude inputs;
    # clamp against rounding-induced negative variance.
    mean = jnp.mean(x, axis=-1, keepdims=True)
    ex2 = jnp.mean(x * x, axis=-1, keepdims=True)
    var = jnp.maximum(ex2 - mean * mean, 0.0)
    inv = lax.rsqrt(var + EPS)
    w = w_ref[...].astype(jnp.float32)          # (1, D) broadcasts over rows
    b = b_ref[...].astype(jnp.float32)
    o_ref[...] = ((x - mean) * inv * w + b).astype(o_ref.dtype)


def _ln_kernel_nobias(x_ref, w_ref, o_ref):
    x = x_ref[...].astype(jnp.float32)
    mean = jnp.mean(x, axis=-1, keepdims=True)
    ex2 = jnp.mean(x * x, axis=-1, keepdims=True)
    var = jnp.maximum(ex2 - mean * mean, 0.0)
    inv = lax.rsqrt(var + EPS)
    w = w_ref[...].astype(jnp.float32)
    o_ref[...] = ((x - mean) * inv * w).astype(o_ref.dtype)


def _round_up(x, m):
    return ((x + m - 1) // m) * m


def _vmem_budgets():
    """Generation-aware (pipeline_buffer_budget, vmem_limit_bytes).

    v5e/v6e have 128 MiB physical VMEM, v7x only 64 MiB; keep ~16 MiB of
    headroom under the physical size for compiler-internal scratch.
    """
    try:
        cap = int(pltpu.get_tpu_info().vmem_capacity_bytes)
    except Exception:                      # unknown / emulated: assume small (v7x) VMEM
        cap = 64 * _MIB
    budget = cap // 2                      # for the double-buffered data tiles
    vmem_limit = max(48 * _MIB, min(cap - 16 * _MIB, 112 * _MIB))
    return budget, vmem_limit


def _pick_tiling(rows, d, itemsize):
    """Pick (row_tile, vmem_limit_bytes) for the flattened (rows, d) problem."""
    # Sublane granularity by packing: 8 rows for 32-bit, 16 for bf16,
    # 32 for int8/fp8 -- avoids packed-sublane masking/relayout on load/store.
    sublane = max(8, 32 // itemsize)
    budget, vmem_limit = _vmem_budgets()

    # Per tile-row footprint: 2x double-buffered input + 2x double-buffered
    # output (input dtype) + ~3 f32-sized full-tile temporaries in the body.
    bytes_per_row = d * (4 * itemsize + 3 * 4)
    if sublane * bytes_per_row > vmem_limit:
        raise ValueError(
            f"LayerNorm hidden size {d} is too large for a single "
            f"{sublane}-row tile under the {vmem_limit // _MIB} MiB VMEM limit.")

    rows_r = _round_up(rows, sublane)

    # Largest tile under the budget, capped at 1024 rows (512-class tiles are
    # already ~85% of HBM roofline) and at the problem size.
    rt = (budget // bytes_per_row) // sublane * sublane
    rt = max(sublane, min(rt, 1024, rows_r))

    # Pipelining: target >= 8 grid steps so the BlockSpec double-buffering can
    # actually overlap DMA with compute (1-2 steps leaves the first read and
    # last write fully exposed), but never shrink below ~256 rows where
    # per-step overhead (~0.35us) starts to bite.
    if rows_r > 2 * 256:
        rt = min(rt, max(256, _round_up(pl.cdiv(rows, 8), sublane)))

    # v7x TensorCore balance: an odd grid on the single "parallel" axis gives
    # one core an extra step; nudge the tile down until the step count is
    # even. Correctness is unaffected; no effect on single-TC v5e/v6e.
    grid_n = pl.cdiv(rows, rt)
    if grid_n > 1 and grid_n % 2 == 1:
        cand = rt
        while cand > sublane:
            cand -= sublane
            g = pl.cdiv(rows, cand)
            if g > 2 * grid_n:             # don't chase parity into tiny tiles
                break
            if g % 2 == 0:
                rt = cand
                break

    return rt, vmem_limit


@jax.jit
def layer_norm(x, weight, bias=None):
    """LayerNorm over the last axis of x with learnable weight / optional bias."""
    orig_shape = x.shape
    d = orig_shape[-1]
    x2 = x.reshape(-1, d)
    rows = x2.shape[0]
    itemsize = jnp.dtype(x.dtype).itemsize

    row_tile, vmem_limit = _pick_tiling(rows, d, itemsize)
    grid = (pl.cdiv(rows, row_tile),)      # partial last block masked by Pallas

    have_bias = bias is not None
    w2 = weight.reshape(1, d)

    x_spec = pl.BlockSpec((row_tile, d), lambda i: (i, 0))
    p_spec = pl.BlockSpec((1, d), lambda i: (0, 0))       # resident weight / bias
    o_spec = pl.BlockSpec((row_tile, d), lambda i: (i, 0))
    # TODO(synk): for hidden sizes that are not a multiple of 128 the output
    # store is a masked partial write (vst.msk). Real transformer widths are
    # already lane-dense; padding D here would add an extra HBM pass to a
    # mem-bound kernel, so we deliberately do not pad.

    cost = pl.CostEstimate(
        flops=8 * rows * d,
        transcendentals=rows,                              # rsqrt per row
        bytes_accessed=2 * rows * d * itemsize
        + (2 if have_bias else 1) * d * jnp.dtype(weight.dtype).itemsize,
    )

    if have_bias:
        kernel = _ln_kernel_bias
        in_specs = [x_spec, p_spec, p_spec]
        operands = (x2, w2, bias.reshape(1, d))
    else:
        kernel = _ln_kernel_nobias
        in_specs = [x_spec, p_spec]
        operands = (x2, w2)

    out = pl.pallas_call(
        kernel,
        out_shape=jax.ShapeDtypeStruct((rows, d), x.dtype),
        grid_spec=pltpu.PrefetchScalarGridSpec(
            num_scalar_prefetch=0,
            grid=grid,
            in_specs=in_specs,
            out_specs=o_spec,
        ),
        compiler_params=pltpu.CompilerParams(
            dimension_semantics=("parallel",),
            vmem_limit_bytes=vmem_limit,
        ),
        cost_estimate=cost,
    )(*operands)

    return out.reshape(orig_shape)


def _reference(x, weight, bias):
    mean = jnp.mean(x, axis=-1, keepdims=True)
    var = jnp.mean((x - mean) ** 2, axis=-1, keepdims=True)
    y = (x - mean) * lax.rsqrt(var + EPS) * weight
    if bias is not None:
        y = y + bias
    return y


if __name__ == "__main__":
    key = jax.random.PRNGKey(0)
    kx, kw, kb = jax.random.split(key, 3)

    batch, seq, hidden = 2, 8, 32    # ndim = hidden = 32
    x = jax.random.normal(kx, (batch, seq, hidden), dtype=jnp.float32)

    # Module __init__: weight = ones(ndim), bias = zeros(ndim); perturb to
    # exercise the scale/shift paths deterministically.
    weight = jnp.ones((hidden,), jnp.float32) + 0.1 * jax.random.normal(kw, (hidden,))
    bias = jnp.zeros((hidden,), jnp.float32) + 0.1 * jax.random.normal(kb, (hidden,))

    # bias=True path
    out = jax.block_until_ready(layer_norm(x, weight, bias))
    ref = _reference(x, weight, bias)
    assert out.shape == x.shape and out.dtype == x.dtype
    assert jnp.max(jnp.abs(out - ref)) < 1e-5

    # bias=False path (module with bias=None)
    out_nb = jax.block_until_ready(layer_norm(x, weight, None))
    ref_nb = _reference(x, weight, None)
    assert jnp.max(jnp.abs(out_nb - ref_nb)) < 1e-5

    print("KERNEL_OK")
</pallas_src>

<mosaic_0001>
module attributes {stable_mosaic.version = 11 : i64} {
  func.func @_ln_kernel_bias(%arg0: i32, %arg1: memref<16x32xf32, #tpu.memory_space<vmem>>, %arg2: memref<1x32xf32, #tpu.memory_space<vmem>>, %arg3: memref<1x32xf32, #tpu.memory_space<vmem>>, %arg4: memref<16x32xf32, #tpu.memory_space<vmem>>) attributes {dimension_semantics = [#tpu.dimension_semantics<parallel>], iteration_bounds = array<i64: 1>, scalar_prefetch = 0 : i64, scratch_operands = 0 : i64, tpu.core_type = #tpu.core_type<tc>, window_params = [{transform_indices = @transform_0, window_bounds = array<i64: 16, 32>}, {pipeline_mode = #tpu.pipeline_mode<synchronous>, transform_indices = @transform_1, window_bounds = array<i64: 1, 32>}, {pipeline_mode = #tpu.pipeline_mode<synchronous>, transform_indices = @transform_2, window_bounds = array<i64: 1, 32>}, {transform_indices = @transform_3, window_bounds = array<i64: 16, 32>}]} {
    %c0 = arith.constant 0 : index
    %c0_0 = arith.constant 0 : index
    %0 = vector.load %arg1[%c0, %c0_0] : memref<16x32xf32, #tpu.memory_space<vmem>>, vector<16x32xf32>
    %cst = arith.constant dense<0.000000e+00> : vector<16xf32>
    %1 = vector.multi_reduction <add>, %0, %cst [1] : vector<16x32xf32> to vector<16xf32>
    %2 = vector.shape_cast %1 : vector<16xf32> to vector<16x1xf32>
    %cst_1 = arith.constant 3.200000e+01 : f32
    %3 = vector.broadcast %cst_1 : f32 to vector<16x1xf32>
    %4 = arith.divf %2, %3 : vector<16x1xf32>
    %5 = arith.mulf %0, %0 : vector<16x32xf32>
    %cst_2 = arith.constant dense<0.000000e+00> : vector<16xf32>
    %6 = vector.multi_reduction <add>, %5, %cst_2 [1] : vector<16x32xf32> to vector<16xf32>
    %7 = vector.shape_cast %6 : vector<16xf32> to vector<16x1xf32>
    %cst_3 = arith.constant 3.200000e+01 : f32
    %8 = vector.broadcast %cst_3 : f32 to vector<16x1xf32>
    %9 = arith.divf %7, %8 : vector<16x1xf32>
    %10 = arith.mulf %4, %4 : vector<16x1xf32>
    %11 = arith.subf %9, %10 : vector<16x1xf32>
    %cst_4 = arith.constant 0.000000e+00 : f32
    %12 = vector.broadcast %cst_4 : f32 to vector<16x1xf32>
    %13 = arith.maximumf %11, %12 : vector<16x1xf32>
    %cst_5 = arith.constant 9.99999974E-6 : f32
    %14 = vector.broadcast %cst_5 : f32 to vector<16x1xf32>
    %15 = arith.addf %13, %14 : vector<16x1xf32>
    %16 = math.rsqrt %15 : vector<16x1xf32>
    %c0_6 = arith.constant 0 : index
    %c0_7 = arith.constant 0 : index
    %17 = vector.load %arg2[%c0_6, %c0_7] : memref<1x32xf32, #tpu.memory_space<vmem>>, vector<1x32xf32>
    %c0_8 = arith.constant 0 : index
    %c0_9 = arith.constant 0 : index
    %18 = vector.load %arg3[%c0_8, %c0_9] : memref<1x32xf32, #tpu.memory_space<vmem>>, vector<1x32xf32>
    %19 = vector.broadcast %4 : vector<16x1xf32> to vector<16x32xf32>
    %20 = arith.subf %0, %19 : vector<16x32xf32>
    %21 = vector.broadcast %16 : vector<16x1xf32> to vector<16x32xf32>
    %22 = arith.mulf %20, %21 : vector<16x32xf32>
    %23 = vector.broadcast %17 : vector<1x32xf32> to vector<16x32xf32>
    %24 = arith.mulf %22, %23 : vector<16x32xf32>
    %25 = vector.broadcast %18 : vector<1x32xf32> to vector<16x32xf32>
    %26 = arith.addf %24, %25 : vector<16x32xf32>
    %c0_10 = arith.constant 0 : index
    %c0_11 = arith.constant 0 : index
    %27 = vector.load %arg4[%c0_10, %c0_11] : memref<16x32xf32, #tpu.memory_space<vmem>>, vector<16x32xf32>
    tpu.vector_store %arg4[%c0_10, %c0_11], %26 {strides = array<i32>} : memref<16x32xf32, #tpu.memory_space<vmem>>, vector<16x32xf32>,
    return
  }
  func.func @transform_0(%arg0: i32) -> (i32, i32) {
    %c0_i32 = arith.constant 0 : i32
    %c0_i32_0 = arith.constant 0 : i32
    return %arg0, %c0_i32 : i32, i32
  }
  func.func @transform_1(%arg0: i32) -> (i32, i32) {
    %c0_i32 = arith.constant 0 : i32
    %c0_i32_0 = arith.constant 0 : i32
    %c0_i32_1 = arith.constant 0 : i32
    return %c0_i32, %c0_i32_0 : i32, i32
  }
  func.func @transform_2(%arg0: i32) -> (i32, i32) {
    %c0_i32 = arith.constant 0 : i32
    %c0_i32_0 = arith.constant 0 : i32
    %c0_i32_1 = arith.constant 0 : i32
    return %c0_i32, %c0_i32_0 : i32, i32
  }
  func.func @transform_3(%arg0: i32) -> (i32, i32) {
    %c0_i32 = arith.constant 0 : i32
    %c0_i32_0 = arith.constant 0 : i32
    return %arg0, %c0_i32 : i32, i32
  }
}

</mosaic_0001>

<llo_original>
// kernel: layer_norm.1
$region0: #{layer_norm.1}
  #allocation0 [shape = 'u32[]', space=smem, size = 0x4, offset = 0x4, fixed_abs, tag = 'smem constant byte address 0x4 - core index']
  #allocation1 [shape = 'u32[144,128]{1,0:T(1,128)}', space=vmem, size = 0x12000, scoped, tag = 'internal scratch']
  %s0 = inlined_call_operand.hbm [shape: f32[16,32], index: 0, kind: input, shape index: {}]
  %s1 = inlined_call_operand.vmem [shape: f32[1,32], index: 1, kind: input, shape index: {}]
  %s2 = inlined_call_operand.vmem [shape: f32[1,32], index: 2, kind: input, shape index: {}]
  %s3 = inlined_call_operand.hbm [shape: f32[16,32], index: 3, kind: output, shape index: {}]
  %s4 = sld [smem:[#allocation0]]
  $region26: #{layer_norm.1} parent=0
    _
  %s6 = ssub.s32 1, %s4
  %s7 = scalar_select 0, %s6, %s4
  $region1: #{layer_norm.1} parent=0
    #allocation2 [shape = 'u8[8192]{0}', space=vmem, size = 0x2000, scoped, tag = 'input window, operand 0, single buffered']
    #allocation3 [shape = 's32[1]{0}', space=sflag, size = 0x4, scoped, tag = 'scoped memory for layer_norm.1']
    #allocation4 [shape = 's32[1]{0}', space=sflag, size = 0x4, scoped, tag = 'scoped memory for layer_norm.1']
    #allocation5 [shape = 'u8[8192]{0}', space=vmem, size = 0x2000, scoped, tag = 'output window, operand 0, single buffered']
    %8 = vsyncpa [#allocation3], 0
    %9 = vsyncpa [#allocation4], 0
    // Predicated region
    $region2: #{layer_norm.1} parent=1 // pred_check
      _
    $region3: #{layer_norm.1} parent=1 // pred_check_branch
      %11 = sbr.rel (0) target = $region5
    $region4: #{layer_norm.1} parent=1 // pred_region
      %s13 = ssub.s32 256, 256
      %14 = vsyncadd [#allocation3], %s13
      %s15 = sshll.u32 [#allocation2], 4
      %s16 = int_to_ptr.vmem [resolvable:$true] %s15
      %21 = dma.hbm_to_vmem [thread:$0]  %s0, 256, %s16, [#allocation3], 128, 128, 8
    $region5: #{layer_norm.1} parent=1 // pred_fallthru
      _
    // Predicated region
    $region6: #{layer_norm.1} parent=1 // pred_check
      _
    $region7: #{layer_norm.1} parent=1 // pred_check_branch
      %23 = sbr.rel (0) target = $region9
    $region8: #{layer_norm.1} parent=1 // pred_region
      _
    $region9: #{layer_norm.1} parent=1 // pred_fallthru
      _
    // Predicated region
    $region10: #{layer_norm.1} parent=1 // pred_check
      _
    $region11: #{layer_norm.1} parent=1 // pred_check_branch
      %25 = sbr.rel (0) target = $region13
    $region12: #{layer_norm.1} parent=1 // pred_region
      _
    $region13: #{layer_norm.1} parent=1 // pred_fallthru
      _
    // Predicated region
    $region14: #{layer_norm.1} parent=1 // pred_check
      _
    $region15: #{layer_norm.1} parent=1 // pred_check_branch
      %27 = sbr.rel (0) target = $region17
    $region16: #{layer_norm.1} parent=1 // pred_region
      %28 = dma.done [#allocation3], 256
    $region17: #{layer_norm.1} parent=1 // pred_fallthru
      _
    %v29 = vld [vmem:[#allocation2] sm:$0xff]
    %v30 = vld [vmem:[#allocation2 + $0x8] sm:$0xff]
    %vm31 = vcmask 261120
    %v32 = vsel %vm31, %v29, 0.0
    %33 = vadd.xlane.f32.xlu0 %v32
    %v34 = vpop.xlane.xlu0 %33
    %v35 = vsel %vm31, %v30, 0.0
    %36 = vadd.xlane.f32.xlu0 %v35
    %v37 = vpop.xlane.xlu0 %36
    %v38 = vrcp.pop 32.0
    %v39 = vmul.f32 %v34, %v38
    %v40 = vmul.f32 %v37, %v38
    %v41 = vmul.f32 %v29, %v29
    %v42 = vmul.f32 %v30, %v30
    %v43 = vsel %vm31, %v41, 0.0
    %44 = vadd.xlane.f32.xlu0 %v43
    %v45 = vpop.xlane.xlu0 %44
    %v46 = vsel %vm31, %v42, 0.0
    %47 = vadd.xlane.f32.xlu0 %v46
    %v48 = vpop.xlane.xlu0 %47
    %v49 = vmul.f32 %v45, %v38
    %v50 = vmul.f32 %v48, %v38
    %v51 = vmul.f32 %v39, %v39
    %v52 = vmul.f32 %v40, %v40
    %v53 = vsub.f32 %v49, %v51
    %v54 = vsub.f32 %v50, %v52
    %v55 = vmax.f32 %v53, 0.0
    %v56 = vmax.f32 %v54, 0.0
    %v57 = vadd.f32 %v55, 1e-05
    %v58 = vadd.f32 %v56, 1e-05
    %v59 = vrsqrt.pop %v57
    %v60 = vrsqrt.pop %v58
    %v61 = vld [vmem:[%s1] sm:$0x1]
    %v62 = vld [vmem:[%s2] sm:$0x1]
    %v63 = vsub.f32 %v29, %v39
    %v64 = vsub.f32 %v30, %v40
    %v65 = vmul.f32 %v63, %v59
    %v66 = vmul.f32 %v64, %v60
    %v68 = vlaneseq
    %v69 = vshrl.u32 %v68, 7
    %v70 = vsub.s32 0, %v69
    %v71 = vrot.slane %v61, %v70
    %v73 = vmul.f32 %v65, %v71
    %v74 = vmul.f32 %v66, %v71
    %v76 = vlaneseq
    %v77 = vshrl.u32 %v76, 7
    %v78 = vsub.s32 0, %v77
    %v79 = vrot.slane %v62, %v78
    %v81 = vadd.f32 %v73, %v79
    %v82 = vadd.f32 %v74, %v79
    %83 = vst.msk [vmem:[#allocation5] sm:$0xff] %vm31, %v81
    %84 = vst.msk [vmem:[#allocation5 + $0x8] sm:$0xff] %vm31, %v82
    // Predicated region
    $region18: #{layer_norm.1} parent=1 // pred_check
      _
    $region19: #{layer_norm.1} parent=1 // pred_check_branch
      %86 = sbr.rel (0) target = $region21
    $region20: #{layer_norm.1} parent=1 // pred_region
      %s88 = ssub.s32 256, 256
      %89 = vsyncadd [#allocation4], %s88
      %s90 = sshll.u32 [#allocation5], 4
      %s91 = int_to_ptr.vmem [resolvable:$true] %s90
      %96 = dma.vmem_to_hbm [thread:$0]  %s91, 256, %s3, [#allocation4], 128, 128, 8
    $region21: #{layer_norm.1} parent=1 // pred_fallthru
      _
    // Predicated region
    $region22: #{layer_norm.1} parent=1 // pred_check
      _
    $region23: #{layer_norm.1} parent=1 // pred_check_branch
      %98 = sbr.rel (0) target = $region25
    $region24: #{layer_norm.1} parent=1 // pred_region
      %99 = dma.done [#allocation4], 256
    $region25: #{layer_norm.1} parent=1 // pred_fallthru
      _
    %100 = vsyncpa [#allocation3], 1
    %101 = vsyncpa [#allocation4], 1

</llo_original>
